<compile_context>
chip_gen: v5e
topology: v5e:2x2
jax: 0.10.0
libtpu: 0.0.40
codegen_flags: <defaults>
</compile_context>

<pallas_src>
import functools

import jax
import jax.numpy as jnp
from jax.experimental import pallas as pl
from jax.experimental.pallas import tpu as pltpu

LANE = 128
SUBLANE = 8


def _round_up(x, m):
    return ((x + m - 1) // m) * m


# ---------------------------------------------------------------------------
# Fused kernel: (encoder -> emb, decoder -> recon) for BOTH edge inputs.
# refs = (to_ref, from_ref, w_0 .. w_{L-1}, bias_stack,
#         emb_to_ref, emb_from_ref, rec_to_ref, rec_from_ref)
# ---------------------------------------------------------------------------
def _vis_kernel(n_enc, n_dec, latent_real, out_real, *refs):
    n_layers = n_enc + n_dec
    to_ref, from_ref = refs[0], refs[1]
    w_refs = refs[2:2 + n_layers]
    b_ref = refs[2 + n_layers]
    emb_to_ref, emb_from_ref, rec_to_ref, rec_from_ref = refs[2 + n_layers + 1:]

    b_all = b_ref[...]  # (rows_padded, max_width) f32, loaded once

    def run_stack(h, start, count):
        for i in range(count):
            li = start + i
            w = w_refs[li][...]
            out_p = w.shape[1]
            b = b_all[li:li + 1, :out_p]                       # (1, out_p), static
            h = jnp.dot(h, w, preferred_element_type=jnp.float32) + b
            if i < count - 1:                                   # ReLU except last
                h = jnp.maximum(h, 0.0)
        return h

    for x_ref, emb_ref, rec_ref in ((to_ref, emb_to_ref, rec_to_ref),
                                    (from_ref, emb_from_ref, rec_from_ref)):
        h = x_ref[...].astype(jnp.float32)
        h = run_stack(h, 0, n_enc)
        # Store real-width embedding (padded cols are exactly zero anyway).
        emb_ref[...] = h[:, :latent_real].astype(emb_ref.dtype)
        h = run_stack(h, n_enc, n_dec)
        rec_ref[...] = h[:, :out_real].astype(rec_ref.dtype)


# ---------------------------------------------------------------------------
# One-time parameter preparation (OUT of the per-call hot path).
# Zero-pads every layer's output dim to a multiple of 128; zeros propagate
# exactly through Linear+ReLU, so real columns match the unpadded math.
# Biases are stacked into a single (rows_padded, max_width) array.
# ---------------------------------------------------------------------------
def _pad_stack(weights, biases, first_in):
    pw, pb = [], []
    prev = first_in
    for w, b in zip(weights, biases):
        d_in, d_out = w.shape
        out_p = _round_up(d_out, LANE)
        wp = jnp.zeros((prev, out_p), jnp.float32).at[:d_in, :d_out].set(w)
        bp = jnp.zeros((out_p,), jnp.float32).at[:d_out].set(jnp.reshape(b, (d_out,)))
        pw.append(wp)
        pb.append(bp)
        prev = out_p
    return pw, pb


def prepare_vis_params(enc_w, enc_b, dec_w, dec_b):
    d_in = enc_w[0].shape[0]
    latent_real = enc_w[-1].shape[1]
    assert dec_w[0].shape[0] == latent_real, (
        "decoder input dim must equal encoder latent dim for zero-pad alignment")

    enc_wp, enc_bp = _pad_stack(enc_w, enc_b, first_in=d_in)
    latent_p = enc_wp[-1].shape[1]
    dec_wp, dec_bp = _pad_stack(dec_w, dec_b, first_in=latent_p)

    all_w = tuple(enc_wp + dec_wp)
    all_b = enc_bp + dec_bp
    n_layers = len(all_b)
    max_w = max(b.shape[0] for b in all_b)
    rows_p = _round_up(n_layers, SUBLANE)
    b_stack = jnp.zeros((rows_p, max_w), jnp.float32)
    for i, b in enumerate(all_b):
        b_stack = b_stack.at[i, :b.shape[0]].set(b)
    return all_w, b_stack


# ---------------------------------------------------------------------------
# Forward: one fused pallas_call, two inputs, four outputs.
# Static config (n_enc, latent_real, out_real) is bound via functools.partial
# before jit so it stays a Python constant.
# ---------------------------------------------------------------------------
def vis_model_forward(edge_to, edge_from, weights, bias_stack, *,
                      n_enc, latent_real, out_real, tm=None):
    assert edge_from.shape == edge_to.shape
    N, d_in = edge_to.shape
    n_layers = len(weights)
    n_dec = n_layers - n_enc
    dtype = edge_to.dtype

    if tm is None:
        # >=256-row tiles (amortize ~0.35us/step), cap 512 (~85% HBM roofline on
        # v6e), ~8 grid steps at large N so v7x megacore gets several steps/core.
        tm = max(256, min(512, _round_up(-(-N // 8), SUBLANE)))
        tm = min(tm, _round_up(N, SUBLANE))

    grid = (pl.cdiv(N, tm),)

    x_spec = pl.BlockSpec((tm, d_in), lambda i: (i, 0))
    in_specs = [x_spec, x_spec]
    args = [edge_to, edge_from]
    for w in weights:
        # Small constant-index full blocks: resident in VMEM, fetched once.
        in_specs.append(pl.BlockSpec(w.shape, lambda i: (0, 0)))
        args.append(w)
    in_specs.append(pl.BlockSpec(bias_stack.shape, lambda i: (0, 0)))
    args.append(bias_stack)

    emb_spec = pl.BlockSpec((tm, latent_real), lambda i: (i, 0))
    rec_spec = pl.BlockSpec((tm, out_real), lambda i: (i, 0))
    out_specs = [emb_spec, emb_spec, rec_spec, rec_spec]
    out_shape = (
        jax.ShapeDtypeStruct((N, latent_real), dtype),
        jax.ShapeDtypeStruct((N, latent_real), dtype),
        jax.ShapeDtypeStruct((N, out_real), dtype),
        jax.ShapeDtypeStruct((N, out_real), dtype),
    )

    # VMEM budget from actual usage (+2x headroom), clamped to [4, 32] MiB.
    row_bytes = max(LANE, _round_up(d_in, LANE)) * 4       # VMEM lane padding
    io_bytes = 2 * tm * row_bytes * (2 + 4)                 # double-buffered I/O
    w_bytes = 2 * (sum(int(w.size) for w in weights) + int(bias_stack.size)) * 4
    vmem_limit = min(32 << 20, max(4 << 20,
                                   _round_up(2 * (io_bytes + w_bytes), 1 << 20)))

    kernel = functools.partial(_vis_kernel, n_enc, n_dec, latent_real, out_real)

    emb_to, emb_from, rec_to, rec_from = pl.pallas_call(
        kernel,
        out_shape=out_shape,
        grid=grid,
        in_specs=in_specs,
        out_specs=out_specs,
        compiler_params=pltpu.CompilerParams(
            dimension_semantics=("parallel",),
            vmem_limit_bytes=vmem_limit,
        ),
    )(*args)

    return {"umap": (emb_to, emb_from), "recon": (rec_to, rec_from)}


# ---------------------------------------------------------------------------
# Parameter init (matches PyTorch nn.Linear default ranges; deterministic).
# Weights stored as (in_features, out_features) so y = x @ W + b.
# ---------------------------------------------------------------------------
def init_mlp_params(key, dims):
    weights, biases = [], []
    for i in range(len(dims) - 1):
        fan_in, fan_out = dims[i], dims[i + 1]
        key, kw, kb = jax.random.split(key, 3)
        bound = 1.0 / jnp.sqrt(fan_in)
        w = jax.random.uniform(kw, (fan_in, fan_out), jnp.float32,
                               minval=-bound, maxval=bound)
        b = jax.random.uniform(kb, (1, fan_out), jnp.float32,
                               minval=-bound, maxval=bound)
        weights.append(w)
        biases.append(b)
    return weights, biases, key


# Pure-JAX reference for the correctness check.
def _mlp_ref(x, weights, biases):
    h = x
    n = len(weights)
    for i, (w, b) in enumerate(zip(weights, biases)):
        h = h @ w + b
        if i < n - 1:
            h = jnp.maximum(h, 0.0)
    return h


def _check(outputs, edge_to, edge_from, enc_w, enc_b, dec_w, dec_b):
    emb_to_ref = _mlp_ref(edge_to, enc_w, enc_b)
    emb_from_ref = _mlp_ref(edge_from, enc_w, enc_b)
    rec_to_ref = _mlp_ref(emb_to_ref, dec_w, dec_b)
    rec_from_ref = _mlp_ref(emb_from_ref, dec_w, dec_b)
    assert jnp.allclose(outputs["umap"][0], emb_to_ref, atol=1e-5, rtol=1e-5)
    assert jnp.allclose(outputs["umap"][1], emb_from_ref, atol=1e-5, rtol=1e-5)
    assert jnp.allclose(outputs["recon"][0], rec_to_ref, atol=1e-5, rtol=1e-5)
    assert jnp.allclose(outputs["recon"][1], rec_from_ref, atol=1e-5, rtol=1e-5)


if __name__ == "__main__":
    # Shapes consistent with the module: VisModel([32, 32, 2], [2, 32, 32]).
    encoder_dims = [32, 32, 2]
    decoder_dims = [2, 32, 32]

    key = jax.random.PRNGKey(0)
    enc_w, enc_b, key = init_mlp_params(key, encoder_dims)
    dec_w, dec_b, key = init_mlp_params(key, decoder_dims)

    # One-time padding/stacking of parameters (out of the hot path).
    weights, bias_stack = prepare_vis_params(enc_w, enc_b, dec_w, dec_b)

    fwd = jax.jit(functools.partial(
        vis_model_forward,
        n_enc=len(enc_w),
        latent_real=encoder_dims[-1],
        out_real=decoder_dims[-1],
    ))

    # Small batch (single grid step).
    key, k1, k2 = jax.random.split(key, 3)
    edge_to = jax.random.normal(k1, (8, encoder_dims[0]), jnp.float32)
    edge_from = jax.random.normal(k2, (8, encoder_dims[0]), jnp.float32)
    outputs = fwd(edge_to, edge_from, weights, bias_stack)
    jax.block_until_ready(outputs)
    _check(outputs, edge_to, edge_from, enc_w, enc_b, dec_w, dec_b)

    # Larger batch: exercises multi-step grid and a partial last block.
    key, k3, k4 = jax.random.split(key, 3)
    edge_to_l = jax.random.normal(k3, (600, encoder_dims[0]), jnp.float32)
    edge_from_l = jax.random.normal(k4, (600, encoder_dims[0]), jnp.float32)
    outputs_l = fwd(edge_to_l, edge_from_l, weights, bias_stack)
    jax.block_until_ready(outputs_l)
    _check(outputs_l, edge_to_l, edge_from_l, enc_w, enc_b, dec_w, dec_b)

    print("KERNEL_OK")
</pallas_src>

<mosaic_0001>
module attributes {stable_mosaic.version = 11 : i64} {
  func.func @_vis_kernel(%arg0: i32, %arg1: memref<8x32xf32, #tpu.memory_space<vmem>>, %arg2: memref<8x32xf32, #tpu.memory_space<vmem>>, %arg3: memref<32x128xf32, #tpu.memory_space<vmem>>, %arg4: memref<128x128xf32, #tpu.memory_space<vmem>>, %arg5: memref<128x128xf32, #tpu.memory_space<vmem>>, %arg6: memref<128x128xf32, #tpu.memory_space<vmem>>, %arg7: memref<8x128xf32, #tpu.memory_space<vmem>>, %arg8: memref<8x2xf32, #tpu.memory_space<vmem>>, %arg9: memref<8x2xf32, #tpu.memory_space<vmem>>, %arg10: memref<8x32xf32, #tpu.memory_space<vmem>>, %arg11: memref<8x32xf32, #tpu.memory_space<vmem>>) attributes {dimension_semantics = [#tpu.dimension_semantics<parallel>], iteration_bounds = array<i64: 1>, scalar_prefetch = 0 : i64, scratch_operands = 0 : i64, tpu.core_type = #tpu.core_type<tc>, window_params = [{transform_indices = @transform_0, window_bounds = array<i64: 8, 32>}, {transform_indices = @transform_1, window_bounds = array<i64: 8, 32>}, {pipeline_mode = #tpu.pipeline_mode<synchronous>, transform_indices = @transform_2, window_bounds = array<i64: 32, 128>}, {pipeline_mode = #tpu.pipeline_mode<synchronous>, transform_indices = @transform_3, window_bounds = array<i64: 128, 128>}, {pipeline_mode = #tpu.pipeline_mode<synchronous>, transform_indices = @transform_4, window_bounds = array<i64: 128, 128>}, {pipeline_mode = #tpu.pipeline_mode<synchronous>, transform_indices = @transform_5, window_bounds = array<i64: 128, 128>}, {pipeline_mode = #tpu.pipeline_mode<synchronous>, transform_indices = @transform_6, window_bounds = array<i64: 8, 128>}, {transform_indices = @transform_7, window_bounds = array<i64: 8, 2>}, {transform_indices = @transform_8, window_bounds = array<i64: 8, 2>}, {transform_indices = @transform_9, window_bounds = array<i64: 8, 32>}, {transform_indices = @transform_10, window_bounds = array<i64: 8, 32>}]} {
    %c0 = arith.constant 0 : index
    %c0_0 = arith.constant 0 : index
    %0 = vector.load %arg7[%c0, %c0_0] : memref<8x128xf32, #tpu.memory_space<vmem>>, vector<8x128xf32>
    %c0_1 = arith.constant 0 : index
    %c0_2 = arith.constant 0 : index
    %1 = vector.load %arg1[%c0_1, %c0_2] : memref<8x32xf32, #tpu.memory_space<vmem>>, vector<8x32xf32>
    %c0_3 = arith.constant 0 : index
    %c0_4 = arith.constant 0 : index
    %2 = vector.load %arg3[%c0_3, %c0_4] : memref<32x128xf32, #tpu.memory_space<vmem>>, vector<32x128xf32>
    %3 = vector.extract_strided_slice %0 {offsets = [0, 0], sizes = [1, 128], strides = [1, 1]} : vector<8x128xf32> to vector<1x128xf32>
    %cst = arith.constant dense<0.000000e+00> : vector<8x128xf32>
    %4 = tpu.matmul %1, %2, %cst {dimension_numbers = #tpu.dot_dimension_numbers<[1], [0], [0], [1], [0, 0, 1, 1], [], []>} : vector<8x32xf32>, vector<32x128xf32>, vector<8x128xf32> -> vector<8x128xf32>
    %5 = vector.broadcast %3 : vector<1x128xf32> to vector<8x128xf32>
    %6 = arith.addf %4, %5 : vector<8x128xf32>
    %cst_5 = arith.constant 0.000000e+00 : f32
    %7 = vector.broadcast %cst_5 : f32 to vector<8x128xf32>
    %8 = arith.maximumf %6, %7 : vector<8x128xf32>
    %c0_6 = arith.constant 0 : index
    %c0_7 = arith.constant 0 : index
    %9 = vector.load %arg4[%c0_6, %c0_7] : memref<128x128xf32, #tpu.memory_space<vmem>>, vector<128x128xf32>
    %10 = vector.extract_strided_slice %0 {offsets = [1, 0], sizes = [1, 128], strides = [1, 1]} : vector<8x128xf32> to vector<1x128xf32>
    %cst_8 = arith.constant dense<0.000000e+00> : vector<8x128xf32>
    %11 = tpu.matmul %8, %9, %cst_8 {dimension_numbers = #tpu.dot_dimension_numbers<[1], [0], [0], [1], [0, 0, 1, 1], [], []>} : vector<8x128xf32>, vector<128x128xf32>, vector<8x128xf32> -> vector<8x128xf32>
    %12 = vector.broadcast %10 : vector<1x128xf32> to vector<8x128xf32>
    %13 = arith.addf %11, %12 : vector<8x128xf32>
    %14 = vector.extract_strided_slice %13 {offsets = [0, 0], sizes = [8, 2], strides = [1, 1]} : vector<8x128xf32> to vector<8x2xf32>
    %c0_9 = arith.constant 0 : index
    %c0_10 = arith.constant 0 : index
    %15 = vector.load %arg8[%c0_9, %c0_10] : memref<8x2xf32, #tpu.memory_space<vmem>>, vector<8x2xf32>
    tpu.vector_store %arg8[%c0_9, %c0_10], %14 {strides = array<i32>} : memref<8x2xf32, #tpu.memory_space<vmem>>, vector<8x2xf32>,
    %c0_11 = arith.constant 0 : index
    %c0_12 = arith.constant 0 : index
    %16 = vector.load %arg5[%c0_11, %c0_12] : memref<128x128xf32, #tpu.memory_space<vmem>>, vector<128x128xf32>
    %17 = vector.extract_strided_slice %0 {offsets = [2, 0], sizes = [1, 128], strides = [1, 1]} : vector<8x128xf32> to vector<1x128xf32>
    %cst_13 = arith.constant dense<0.000000e+00> : vector<8x128xf32>
    %18 = tpu.matmul %13, %16, %cst_13 {dimension_numbers = #tpu.dot_dimension_numbers<[1], [0], [0], [1], [0, 0, 1, 1], [], []>} : vector<8x128xf32>, vector<128x128xf32>, vector<8x128xf32> -> vector<8x128xf32>
    %19 = vector.broadcast %17 : vector<1x128xf32> to vector<8x128xf32>
    %20 = arith.addf %18, %19 : vector<8x128xf32>
    %cst_14 = arith.constant 0.000000e+00 : f32
    %21 = vector.broadcast %cst_14 : f32 to vector<8x128xf32>
    %22 = arith.maximumf %20, %21 : vector<8x128xf32>
    %c0_15 = arith.constant 0 : index
    %c0_16 = arith.constant 0 : index
    %23 = vector.load %arg6[%c0_15, %c0_16] : memref<128x128xf32, #tpu.memory_space<vmem>>, vector<128x128xf32>
    %24 = vector.extract_strided_slice %0 {offsets = [3, 0], sizes = [1, 128], strides = [1, 1]} : vector<8x128xf32> to vector<1x128xf32>
    %cst_17 = arith.constant dense<0.000000e+00> : vector<8x128xf32>
    %25 = tpu.matmul %22, %23, %cst_17 {dimension_numbers = #tpu.dot_dimension_numbers<[1], [0], [0], [1], [0, 0, 1, 1], [], []>} : vector<8x128xf32>, vector<128x128xf32>, vector<8x128xf32> -> vector<8x128xf32>
    %26 = vector.broadcast %24 : vector<1x128xf32> to vector<8x128xf32>
    %27 = arith.addf %25, %26 : vector<8x128xf32>
    %28 = vector.extract_strided_slice %27 {offsets = [0, 0], sizes = [8, 32], strides = [1, 1]} : vector<8x128xf32> to vector<8x32xf32>
    %c0_18 = arith.constant 0 : index
    %c0_19 = arith.constant 0 : index
    %29 = vector.load %arg10[%c0_18, %c0_19] : memref<8x32xf32, #tpu.memory_space<vmem>>, vector<8x32xf32>
    tpu.vector_store %arg10[%c0_18, %c0_19], %28 {strides = array<i32>} : memref<8x32xf32, #tpu.memory_space<vmem>>, vector<8x32xf32>,
    %c0_20 = arith.constant 0 : index
    %c0_21 = arith.constant 0 : index
    %30 = vector.load %arg2[%c0_20, %c0_21] : memref<8x32xf32, #tpu.memory_space<vmem>>, vector<8x32xf32>
    %c0_22 = arith.constant 0 : index
    %c0_23 = arith.constant 0 : index
    %31 = vector.load %arg3[%c0_22, %c0_23] : memref<32x128xf32, #tpu.memory_space<vmem>>, vector<32x128xf32>
    %32 = vector.extract_strided_slice %0 {offsets = [0, 0], sizes = [1, 128], strides = [1, 1]} : vector<8x128xf32> to vector<1x128xf32>
    %cst_24 = arith.constant dense<0.000000e+00> : vector<8x128xf32>
    %33 = tpu.matmul %30, %31, %cst_24 {dimension_numbers = #tpu.dot_dimension_numbers<[1], [0], [0], [1], [0, 0, 1, 1], [], []>} : vector<8x32xf32>, vector<32x128xf32>, vector<8x128xf32> -> vector<8x128xf32>
    %34 = vector.broadcast %32 : vector<1x128xf32> to vector<8x128xf32>
    %35 = arith.addf %33, %34 : vector<8x128xf32>
    %cst_25 = arith.constant 0.000000e+00 : f32
    %36 = vector.broadcast %cst_25 : f32 to vector<8x128xf32>
    %37 = arith.maximumf %35, %36 : vector<8x128xf32>
    %c0_26 = arith.constant 0 : index
    %c0_27 = arith.constant 0 : index
    %38 = vector.load %arg4[%c0_26, %c0_27] : memref<128x128xf32, #tpu.memory_space<vmem>>, vector<128x128xf32>
    %39 = vector.extract_strided_slice %0 {offsets = [1, 0], sizes = [1, 128], strides = [1, 1]} : vector<8x128xf32> to vector<1x128xf32>
    %cst_28 = arith.constant dense<0.000000e+00> : vector<8x128xf32>
    %40 = tpu.matmul %37, %38, %cst_28 {dimension_numbers = #tpu.dot_dimension_numbers<[1], [0], [0], [1], [0, 0, 1, 1], [], []>} : vector<8x128xf32>, vector<128x128xf32>, vector<8x128xf32> -> vector<8x128xf32>
    %41 = vector.broadcast %39 : vector<1x128xf32> to vector<8x128xf32>
    %42 = arith.addf %40, %41 : vector<8x128xf32>
    %43 = vector.extract_strided_slice %42 {offsets = [0, 0], sizes = [8, 2], strides = [1, 1]} : vector<8x128xf32> to vector<8x2xf32>
    %c0_29 = arith.constant 0 : index
    %c0_30 = arith.constant 0 : index
    %44 = vector.load %arg9[%c0_29, %c0_30] : memref<8x2xf32, #tpu.memory_space<vmem>>, vector<8x2xf32>
    tpu.vector_store %arg9[%c0_29, %c0_30], %43 {strides = array<i32>} : memref<8x2xf32, #tpu.memory_space<vmem>>, vector<8x2xf32>,
    %c0_31 = arith.constant 0 : index
    %c0_32 = arith.constant 0 : index
    %45 = vector.load %arg5[%c0_31, %c0_32] : memref<128x128xf32, #tpu.memory_space<vmem>>, vector<128x128xf32>
    %46 = vector.extract_strided_slice %0 {offsets = [2, 0], sizes = [1, 128], strides = [1, 1]} : vector<8x128xf32> to vector<1x128xf32>
    %cst_33 = arith.constant dense<0.000000e+00> : vector<8x128xf32>
    %47 = tpu.matmul %42, %45, %cst_33 {dimension_numbers = #tpu.dot_dimension_numbers<[1], [0], [0], [1], [0, 0, 1, 1], [], []>} : vector<8x128xf32>, vector<128x128xf32>, vector<8x128xf32> -> vector<8x128xf32>
    %48 = vector.broadcast %46 : vector<1x128xf32> to vector<8x128xf32>
    %49 = arith.addf %47, %48 : vector<8x128xf32>
    %cst_34 = arith.constant 0.000000e+00 : f32
    %50 = vector.broadcast %cst_34 : f32 to vector<8x128xf32>
    %51 = arith.maximumf %49, %50 : vector<8x128xf32>
    %c0_35 = arith.constant 0 : index
    %c0_36 = arith.constant 0 : index
    %52 = vector.load %arg6[%c0_35, %c0_36] : memref<128x128xf32, #tpu.memory_space<vmem>>, vector<128x128xf32>
    %53 = vector.extract_strided_slice %0 {offsets = [3, 0], sizes = [1, 128], strides = [1, 1]} : vector<8x128xf32> to vector<1x128xf32>
    %cst_37 = arith.constant dense<0.000000e+00> : vector<8x128xf32>
    %54 = tpu.matmul %51, %52, %cst_37 {dimension_numbers = #tpu.dot_dimension_numbers<[1], [0], [0], [1], [0, 0, 1, 1], [], []>} : vector<8x128xf32>, vector<128x128xf32>, vector<8x128xf32> -> vector<8x128xf32>
    %55 = vector.broadcast %53 : vector<1x128xf32> to vector<8x128xf32>
    %56 = arith.addf %54, %55 : vector<8x128xf32>
    %57 = vector.extract_strided_slice %56 {offsets = [0, 0], sizes = [8, 32], strides = [1, 1]} : vector<8x128xf32> to vector<8x32xf32>
    %c0_38 = arith.constant 0 : index
    %c0_39 = arith.constant 0 : index
    %58 = vector.load %arg11[%c0_38, %c0_39] : memref<8x32xf32, #tpu.memory_space<vmem>>, vector<8x32xf32>
    tpu.vector_store %arg11[%c0_38, %c0_39], %57 {strides = array<i32>} : memref<8x32xf32, #tpu.memory_space<vmem>>, vector<8x32xf32>,
    return
  }
  func.func @transform_0(%arg0: i32) -> (i32, i32) {
    %c0_i32 = arith.constant 0 : i32
    %c0_i32_0 = arith.constant 0 : i32
    return %arg0, %c0_i32 : i32, i32
  }
  func.func @transform_1(%arg0: i32) -> (i32, i32) {
    %c0_i32 = arith.constant 0 : i32
    %c0_i32_0 = arith.constant 0 : i32
    return %arg0, %c0_i32 : i32, i32
  }
  func.func @transform_2(%arg0: i32) -> (i32, i32) {
    %c0_i32 = arith.constant 0 : i32
    %c0_i32_0 = arith.constant 0 : i32
    %c0_i32_1 = arith.constant 0 : i32
    return %c0_i32, %c0_i32_0 : i32, i32
  }
  func.func @transform_3(%arg0: i32) -> (i32, i32) {
    %c0_i32 = arith.constant 0 : i32
    %c0_i32_0 = arith.constant 0 : i32
    %c0_i32_1 = arith.constant 0 : i32
    return %c0_i32, %c0_i32_0 : i32, i32
  }
  func.func @transform_4(%arg0: i32) -> (i32, i32) {
    %c0_i32 = arith.constant 0 : i32
    %c0_i32_0 = arith.constant 0 : i32
    %c0_i32_1 = arith.constant 0 : i32
    return %c0_i32, %c0_i32_0 : i32, i32
  }
  func.func @transform_5(%arg0: i32) -> (i32, i32) {
    %c0_i32 = arith.constant 0 : i32
    %c0_i32_0 = arith.constant 0 : i32
    %c0_i32_1 = arith.constant 0 : i32
    return %c0_i32, %c0_i32_0 : i32, i32
  }
  func.func @transform_6(%arg0: i32) -> (i32, i32) {
    %c0_i32 = arith.constant 0 : i32
    %c0_i32_0 = arith.constant 0 : i32
    %c0_i32_1 = arith.constant 0 : i32
    return %c0_i32, %c0_i32_0 : i32, i32
  }
  func.func @transform_7(%arg0: i32) -> (i32, i32) {
    %c0_i32 = arith.constant 0 : i32
    %c0_i32_0 = arith.constant 0 : i32
    return %arg0, %c0_i32 : i32, i32
  }
  func.func @transform_8(%arg0: i32) -> (i32, i32) {
    %c0_i32 = arith.constant 0 : i32
    %c0_i32_0 = arith.constant 0 : i32
    return %arg0, %c0_i32 : i32, i32
  }
  func.func @transform_9(%arg0: i32) -> (i32, i32) {
    %c0_i32 = arith.constant 0 : i32
    %c0_i32_0 = arith.constant 0 : i32
    return %arg0, %c0_i32 : i32, i32
  }
  func.func @transform_10(%arg0: i32) -> (i32, i32) {
    %c0_i32 = arith.constant 0 : i32
    %c0_i32_0 = arith.constant 0 : i32
    return %arg0, %c0_i32 : i32, i32
  }
}

</mosaic_0001>

<llo_original>
// kernel: vis_model_forward.1
$region0: #{vis_model_forward.1}
  #allocation0 [shape = 'u32[]', space=smem, size = 0x4, offset = 0x4, fixed_abs, tag = 'smem constant byte address 0x4 - core index']
  #allocation1 [shape = 'u32[72,128]{1,0:T(1,128)}', space=vmem, size = 0x9000, scoped, tag = 'internal scratch']
  %s0 = inlined_call_operand.hbm [shape: f32[8,32], index: 0, kind: input, shape index: {}]
  %s1 = inlined_call_operand.hbm [shape: f32[8,32], index: 1, kind: input, shape index: {}]
  %s2 = inlined_call_operand.hbm [shape: f32[32,128], index: 2, kind: input, shape index: {}]
  %s3 = inlined_call_operand.hbm [shape: f32[128,128], index: 3, kind: input, shape index: {}]
  %s4 = inlined_call_operand.hbm [shape: f32[128,128], index: 4, kind: input, shape index: {}]
  %s5 = inlined_call_operand.hbm [shape: f32[128,128], index: 5, kind: input, shape index: {}]
  %s6 = inlined_call_operand.hbm [shape: f32[8,128], index: 6, kind: input, shape index: {}]
  %s7 = inlined_call_operand.vmem [shape: f32[8,2], index: 7, kind: output, shape index: {0}]
  %s8 = inlined_call_operand.vmem [shape: f32[8,2], index: 8, kind: output, shape index: {1}]
  %s9 = inlined_call_operand.hbm [shape: f32[8,32], index: 9, kind: output, shape index: {2}]
  %s10 = inlined_call_operand.hbm [shape: f32[8,32], index: 10, kind: output, shape index: {3}]
  %11 = xla_tuple %s7, %s8, %s9, %s10
  %s12 = sld [smem:[#allocation0]]
  $region90: #{vis_model_forward.1} parent=0
    _
  %s14 = ssub.s32 1, %s12
  %s15 = scalar_select 0, %s14, %s12
  $region1: #{vis_model_forward.1} parent=0
    #allocation2 [shape = 'u8[4096]{0}', space=vmem, size = 0x1000, scoped, tag = 'input window, operand 0, single buffered']
    #allocation3 [shape = 's32[1]{0}', space=sflag, size = 0x4, scoped, tag = 'scoped memory for vis_model_forward.1']
    #allocation4 [shape = 's32[1]{0}', space=sflag, size = 0x4, scoped, tag = 'scoped memory for vis_model_forward.1']
    #allocation5 [shape = 'u8[4096]{0}', space=vmem, size = 0x1000, scoped, tag = 'input window, operand 1, single buffered']
    #allocation6 [shape = 's32[1]{0}', space=sflag, size = 0x4, scoped, tag = 'scoped memory for vis_model_forward.1']
    #allocation7 [shape = 'u8[16384]{0}', space=vmem, size = 0x4000, scoped, tag = 'input window, operand 2, single buffered']
    #allocation8 [shape = 'u8[65536]{0}', space=vmem, size = 0x10000, scoped, tag = 'input window, operand 3, single buffered']
    #allocation9 [shape = 's32[1]{0}', space=sflag, size = 0x4, scoped, tag = 'scoped memory for vis_model_forward.1']
    #allocation10 [shape = 'u8[65536]{0}', space=vmem, size = 0x10000, scoped, tag = 'input window, operand 4, single buffered']
    #allocation11 [shape = 'u8[65536]{0}', space=vmem, size = 0x10000, scoped, tag = 'input window, operand 5, single buffered']
    #allocation12 [shape = 's32[1]{0}', space=sflag, size = 0x4, scoped, tag = 'scoped memory for vis_model_forward.1']
    #allocation13 [shape = 'u8[4096]{0}', space=vmem, size = 0x1000, scoped, tag = 'input window, operand 6, single buffered']
    #allocation14 [shape = 'u8[4096]{0}', space=vmem, size = 0x1000, scoped, tag = 'output window, operand 2, single buffered']
    #allocation15 [shape = 'u8[4096]{0}', space=vmem, size = 0x1000, scoped, tag = 'output window, operand 3, single buffered']
    #allocation16 [shape = 's32[1]{0}', space=sflag, size = 0x4, scoped, tag = 'scoped memory for vis_model_forward.1']
    %16 = vsyncpa [#allocation3], 0
    %17 = vsyncpa [#allocation6], 0
    %18 = vsyncpa [#allocation9], 0
    %19 = vsyncpa [#allocation12], 0
    %20 = vsyncpa [#allocation4], 0
    %21 = vsyncpa [#allocation16], 0
    // Predicated region
    $region2: #{vis_model_forward.1} parent=1 // pred_check
      _
    $region3: #{vis_model_forward.1} parent=1 // pred_check_branch
      %23 = sbr.rel (0) target = $region5
    $region4: #{vis_model_forward.1} parent=1 // pred_region
      %25 = vsyncadd [#allocation3], 0
      %s27 = sshll.u32 %s0, 4
      %s28 = int_to_ptr.hbm [resolvable:$true] %s27
      %s29 = sshll.u32 [#allocation2], 4
      %s30 = int_to_ptr.vmem [resolvable:$true] %s29
      %32 = dma.hbm_to_vmem [thread:$0]  %s28, 128, %s30, [#allocation3]
    $region5: #{vis_model_forward.1} parent=1 // pred_fallthru
      _
    // Predicated region
    $region6: #{vis_model_forward.1} parent=1 // pred_check
      _
    $region7: #{vis_model_forward.1} parent=1 // pred_check_branch
      %34 = sbr.rel (0) target = $region9
    $region8: #{vis_model_forward.1} parent=1 // pred_region
      %36 = vsyncadd [#allocation6], 0
      %s38 = sshll.u32 %s1, 4
      %s39 = int_to_ptr.hbm [resolvable:$true] %s38
      %s40 = sshll.u32 [#allocation5], 4
      %s41 = int_to_ptr.vmem [resolvable:$true] %s40
      %43 = dma.hbm_to_vmem [thread:$0]  %s39, 128, %s41, [#allocation6]
    $region9: #{vis_model_forward.1} parent=1 // pred_fallthru
      _
    // Predicated region
    $region10: #{vis_model_forward.1} parent=1 // pred_check
      _
    $region11: #{vis_model_forward.1} parent=1 // pred_check_branch
      %45 = sbr.rel (0) target = $region13
    $region12: #{vis_model_forward.1} parent=1 // pred_region
      %47 = vsyncadd [#allocation6], 0
      %s48 = sshll.u32 %s2, 4
      %s49 = int_to_ptr.hbm [resolvable:$true] %s48
      %s50 = sshll.u32 [#allocation7], 4
      %s51 = int_to_ptr.vmem [resolvable:$true] %s50
      %56 = dma.hbm_to_vmem [thread:$0]  %s49, 512, %s51, [#allocation6], 128, 128, 8
    $region13: #{vis_model_forward.1} parent=1 // pred_fallthru
      _
    // Predicated region
    $region14: #{vis_model_forward.1} parent=1 // pred_check
      _
    $region15: #{vis_model_forward.1} parent=1 // pred_check_branch
      %58 = sbr.rel (0) target = $region17
    $region16: #{vis_model_forward.1} parent=1 // pred_region
      %60 = vsyncadd [#allocation9], 0
      %s61 = sshll.u32 %s3, 4
      %s62 = int_to_ptr.hbm [resolvable:$true] %s61
      %s63 = sshll.u32 [#allocation8], 4
      %s64 = int_to_ptr.vmem [resolvable:$true] %s63
      %69 = dma.hbm_to_vmem [thread:$0]  %s62, 2048, %s64, [#allocation9], 128, 128, 8
    $region17: #{vis_model_forward.1} parent=1 // pred_fallthru
      _
    // Predicated region
    $region18: #{vis_model_forward.1} parent=1 // pred_check
      _
    $region19: #{vis_model_forward.1} parent=1 // pred_check_branch
      %71 = sbr.rel (0) target = $region21
    $region20: #{vis_model_forward.1} parent=1 // pred_region
      %73 = vsyncadd [#allocation9], 0
      %s74 = sshll.u32 %s4, 4
      %s75 = int_to_ptr.hbm [resolvable:$true] %s74
      %s76 = sshll.u32 [#allocation10], 4
      %s77 = int_to_ptr.vmem [resolvable:$true] %s76
      %82 = dma.hbm_to_vmem [thread:$0]  %s75, 2048, %s77, [#allocation9], 128, 128, 8
    $region21: #{vis_model_forward.1} parent=1 // pred_fallthru
      _
    // Predicated region
    $region22: #{vis_model_forward.1} parent=1 // pred_check
      _
    $region23: #{vis_model_forward.1} parent=1 // pred_check_branch
      %84 = sbr.rel (0) target = $region25
    $region24: #{vis_model_forward.1} parent=1 // pred_region
      %86 = vsyncadd [#allocation12], 0
      %s87 = sshll.u32 %s5, 4
      %s88 = int_to_ptr.hbm [resolvable:$true] %s87
      %s89 = sshll.u32 [#allocation11], 4
      %s90 = int_to_ptr.vmem [resolvable:$true] %s89
      %95 = dma.hbm_to_vmem [thread:$0]  %s88, 2048, %s90, [#allocation12], 128, 128, 8
    $region25: #{vis_model_forward.1} parent=1 // pred_fallthru
      _
    // Predicated region
    $region26: #{vis_model_forward.1} parent=1 // pred_check
      _
    $region27: #{vis_model_forward.1} parent=1 // pred_check_branch
      %97 = sbr.rel (0) target = $region29
    $region28: #{vis_model_forward.1} parent=1 // pred_region
      %99 = vsyncadd [#allocation12], 0
      %s101 = sshll.u32 %s6, 4
      %s102 = int_to_ptr.hbm [resolvable:$true] %s101
      %s103 = sshll.u32 [#allocation13], 4
      %s104 = int_to_ptr.vmem [resolvable:$true] %s103
      %106 = dma.hbm_to_vmem [thread:$0]  %s102, 128, %s104, [#allocation12]
    $region29: #{vis_model_forward.1} parent=1 // pred_fallthru
      _
    // Predicated region
    $region30: #{vis_model_forward.1} parent=1 // pred_check
      _
    $region31: #{vis_model_forward.1} parent=1 // pred_check_branch
      %108 = sbr.rel (0) target = $region33
    $region32: #{vis_model_forward.1} parent=1 // pred_region
      %110 = dma.done [#allocation3], 128
    $region33: #{vis_model_forward.1} parent=1 // pred_fallthru
      _
    // Predicated region
    $region34: #{vis_model_forward.1} parent=1 // pred_check
      _
    $region35: #{vis_model_forward.1} parent=1 // pred_check_branch
      %112 = sbr.rel (0) target = $region37
    $region36: #{vis_model_forward.1} parent=1 // pred_region
      %114 = dma.done [#allocation6], 128
    $region37: #{vis_model_forward.1} parent=1 // pred_fallthru
      _
    // Predicated region
    $region38: #{vis_model_forward.1} parent=1 // pred_check
      _
    $region39: #{vis_model_forward.1} parent=1 // pred_check_branch
      %116 = sbr.rel (0) target = $region41
    $region40: #{vis_model_forward.1} parent=1 // pred_region
      %118 = dma.done [#allocation6], 512
    $region41: #{vis_model_forward.1} parent=1 // pred_fallthru
      _
    // Predicated region
    $region42: #{vis_model_forward.1} parent=1 // pred_check
      _
    $region43: #{vis_model_forward.1} parent=1 // pred_check_branch
      %120 = sbr.rel (0) target = $region45
    $region44: #{vis_model_forward.1} parent=1 // pred_region
      %122 = dma.done [#allocation9], 2048
    $region45: #{vis_model_forward.1} parent=1 // pred_fallthru
      _
    // Predicated region
    $region46: #{vis_model_forward.1} parent=1 // pred_check
      _
    $region47: #{vis_model_forward.1} parent=1 // pred_check_branch
      %124 = sbr.rel (0) target = $region49
    $region48: #{vis_model_forward.1} parent=1 // pred_region
      %126 = dma.done [#allocation9], 2048
    $region49: #{vis_model_forward.1} parent=1 // pred_fallthru
      _
    // Predicated region
    $region50: #{vis_model_forward.1} parent=1 // pred_check
      _
    $region51: #{vis_model_forward.1} parent=1 // pred_check_branch
      %128 = sbr.rel (0) target = $region53
    $region52: #{vis_model_forward.1} parent=1 // pred_region
      %130 = dma.done [#allocation12], 2048
    $region53: #{vis_model_forward.1} parent=1 // pred_fallthru
      _
    // Predicated region
    $region54: #{vis_model_forward.1} parent=1 // pred_check
      _
    $region55: #{vis_model_forward.1} parent=1 // pred_check_branch
      %132 = sbr.rel (0) target = $region57
    $region56: #{vis_model_forward.1} parent=1 // pred_region
      %134 = dma.done [#allocation12], 128
    $region57: #{vis_model_forward.1} parent=1 // pred_fallthru
      _
    %v135 = vld [vmem:[#allocation13] sm:$0xff]
    %v136 = vld [vmem:[#allocation2] sm:$0xff]
    %v137 = vld [vmem:[#allocation7] sm:$0xff]
    %v138 = vld [vmem:[#allocation7 + $0x8] sm:$0xff]
    %v139 = vld [vmem:[#allocation7 + $0x10] sm:$0xff]
    %v140 = vld [vmem:[#allocation7 + $0x18] sm:$0xff]
    %v141 = vperm.slane %v135, 0
    %vm142 = vcmask 261120
    %v144 = vsel %vm142, %v136, 0
    %146 = vmatpush.msra.mxu0 0.0
    %147 = vmatpush.msra.mxu0 0.0
    %148 = vmatpush.msra.mxu0 0.0
    %149 = vmatpush.msra.mxu0 0.0
    %150 = vmatpush.msra.mxu0 0.0
    %151 = vmatpush.msra.mxu0 0.0
    %152 = vmatpush.msra.mxu0 0.0
    %153 = vmatpush.msra.mxu0 0.0
    %154 = vmatpush.msra.mxu0 0.0
    %155 = vmatpush.msra.mxu0 0.0
    %156 = vmatpush.msra.mxu0 0.0
    %157 = vmatpush.msra.mxu0 0.0
    %158 = vmatpush.msra.mxu0 %v140
    %159 = vmatpush.msra.mxu0 %v139
    %160 = vmatpush.msra.mxu0 %v138
    %161 = vmatpush.msra.mxu0 %v137
    %162 = vmatmul.f32.gmra.mxu0 %v144
    %v163 = vpop.f32.mrf.mxu0
    %v164 = vadd.f32 %v141, %v163
    %165 = vdwg.mxu0
    %v166 = vmax.f32 %v164, 0.0
    %v167 = vld [vmem:[#allocation8] sm:$0xff]
    %v168 = vld [vmem:[#allocation8 + $0x8] sm:$0xff]
    %v169 = vld [vmem:[#allocation8 + $0x10] sm:$0xff]
    %v170 = vld [vmem:[#allocation8 + $0x18] sm:$0xff]
    %v171 = vld [vmem:[#allocation8 + $0x20] sm:$0xff]
    %v172 = vld [vmem:[#allocation8 + $0x28] sm:$0xff]
    %v173 = vld [vmem:[#allocation8 + $0x30] sm:$0xff]
    %v174 = vld [vmem:[#allocation8 + $0x38] sm:$0xff]
    %v175 = vld [vmem:[#allocation8 + $0x40] sm:$0xff]
    %v176 = vld [vmem:[#allocation8 + $0x48] sm:$0xff]
    %v177 = vld [vmem:[#allocation8 + $0x50] sm:$0xff]
    %v178 = vld [vmem:[#allocation8 + $0x58] sm:$0xff]
    %v179 = vld [vmem:[#allocation8 + $0x60] sm:$0xff]
    %v180 = vld [vmem:[#allocation8 + $0x68] sm:$0xff]
    %v181 = vld [vmem:[#allocation8 + $0x70] sm:$0xff]
    %v182 = vld [vmem:[#allocation8 + $0x78] sm:$0xff]
    %v183 = vperm.slane %v135, 1
    %184 = vmatpush.msra.mxu0 %v182
    %185 = vmatpush.msra.mxu0 %v181
    %186 = vmatpush.msra.mxu0 %v180
    %187 = vmatpush.msra.mxu0 %v179
    %188 = vmatpush.msra.mxu0 %v178
    %189 = vmatpush.msra.mxu0 %v177
    %190 = vmatpush.msra.mxu0 %v176
    %191 = vmatpush.msra.mxu0 %v175
    %192 = vmatpush.msra.mxu0 %v174
    %193 = vmatpush.msra.mxu0 %v173
    %194 = vmatpush.msra.mxu0 %v172
    %195 = vmatpush.msra.mxu0 %v171
    %196 = vmatpush.msra.mxu0 %v170
    %197 = vmatpush.msra.mxu0 %v169
    %198 = vmatpush.msra.mxu0 %v168
    %199 = vmatpush.msra.mxu0 %v167
    %200 = vmatmul.f32.gmra.mxu0 %v166
    %v201 = vpop.f32.mrf.mxu0
    %v202 = vadd.f32 %v183, %v201
    %203 = vdwg.mxu0
    %vm204 = vcmask 15360
    %205 = vst.msk [vmem:[%s7] sm:$0xff] %vm204, %v202
    %v206 = vld [vmem:[#allocation10] sm:$0xff]
    %v207 = vld [vmem:[#allocation10 + $0x8] sm:$0xff]
    %v208 = vld [vmem:[#allocation10 + $0x10] sm:$0xff]
    %v209 = vld [vmem:[#allocation10 + $0x18] sm:$0xff]
    %v210 = vld [vmem:[#allocation10 + $0x20] sm:$0xff]
    %v211 = vld [vmem:[#allocation10 + $0x28] sm:$0xff]
    %v212 = vld [vmem:[#allocation10 + $0x30] sm:$0xff]
    %v213 = vld [vmem:[#allocation10 + $0x38] sm:$0xff]
    %v214 = vld [vmem:[#allocation10 + $0x40] sm:$0xff]
    %v215 = vld [vmem:[#allocation10 + $0x48] sm:$0xff]
    %v216 = vld [vmem:[#allocation10 + $0x50] sm:$0xff]
    %v217 = vld [vmem:[#allocation10 + $0x58] sm:$0xff]
    %v218 = vld [vmem:[#allocation10 + $0x60] sm:$0xff]
    %v219 = vld [vmem:[#allocation10 + $0x68] sm:$0xff]
    %v220 = vld [vmem:[#allocation10 + $0x70] sm:$0xff]
    %v221 = vld [vmem:[#allocation10 + $0x78] sm:$0xff]
    %v222 = vperm.slane %v135, 2
    %223 = vmatpush.msra.mxu0 %v221
    %224 = vmatpush.msra.mxu0 %v220
    %225 = vmatpush.msra.mxu0 %v219
    %226 = vmatpush.msra.mxu0 %v218
    %227 = vmatpush.msra.mxu0 %v217
    %228 = vmatpush.msra.mxu0 %v216
    %229 = vmatpush.msra.mxu0 %v215
    %230 = vmatpush.msra.mxu0 %v214
    %231 = vmatpush.msra.mxu0 %v213
    %232 = vmatpush.msra.mxu0 %v212
    %233 = vmatpush.msra.mxu0 %v211
    %234 = vmatpush.msra.mxu0 %v210
    %235 = vmatpush.msra.mxu0 %v209
    %236 = vmatpush.msra.mxu0 %v208
    %237 = vmatpush.msra.mxu0 %v207
    %238 = vmatpush.msra.mxu0 %v206
    %239 = vmatmul.f32.gmra.mxu0 %v202
    %v240 = vpop.f32.mrf.mxu0
    %v241 = vadd.f32 %v222, %v240
    %242 = vdwg.mxu0
    %v243 = vmax.f32 %v241, 0.0
    %v244 = vld [vmem:[#allocation11] sm:$0xff]
    %v245 = vld [vmem:[#allocation11 + $0x8] sm:$0xff]
    %v246 = vld [vmem:[#allocation11 + $0x10] sm:$0xff]
    %v247 = vld [vmem:[#allocation11 + $0x18] sm:$0xff]
    %v248 = vld [vmem:[#allocation11 + $0x20] sm:$0xff]
    %v249 = vld [vmem:[#allocation11 + $0x28] sm:$0xff]
    %v250 = vld [vmem:[#allocation11 + $0x30] sm:$0xff]
    %v251 = vld [vmem:[#allocation11 + $0x38] sm:$0xff]
    %v252 = vld [vmem:[#allocation11 + $0x40] sm:$0xff]
    %v253 = vld [vmem:[#allocation11 + $0x48] sm:$0xff]
    %v254 = vld [vmem:[#allocation11 + $0x50] sm:$0xff]
    %v255 = vld [vmem:[#allocation11 + $0x58] sm:$0xff]
    %v256 = vld [vmem:[#allocation11 + $0x60] sm:$0xff]
    %v257 = vld [vmem:[#allocation11 + $0x68] sm:$0xff]
    %v258 = vld [vmem:[#allocation11 + $0x70] sm:$0xff]
    %v259 = vld [vmem:[#allocation11 + $0x78] sm:$0xff]
    %v260 = vperm.slane %v135, 3
    %261 = vmatpush.msra.mxu0 %v259
    %262 = vmatpush.msra.mxu0 %v258
    %263 = vmatpush.msra.mxu0 %v257
    %264 = vmatpush.msra.mxu0 %v256
    %265 = vmatpush.msra.mxu0 %v255
    %266 = vmatpush.msra.mxu0 %v254
    %267 = vmatpush.msra.mxu0 %v253
    %268 = vmatpush.msra.mxu0 %v252
    %269 = vmatpush.msra.mxu0 %v251
    %270 = vmatpush.msra.mxu0 %v250
    %271 = vmatpush.msra.mxu0 %v249
    %272 = vmatpush.msra.mxu0 %v248
    %273 = vmatpush.msra.mxu0 %v247
    %274 = vmatpush.msra.mxu0 %v246
    %275 = vmatpush.msra.mxu0 %v245
    %276 = vmatpush.msra.mxu0 %v244
    %277 = vmatmul.f32.gmra.mxu0 %v243
    %v278 = vpop.f32.mrf.mxu0
    %v279 = vadd.f32 %v260, %v278
    %280 = vdwg.mxu0
    %281 = vst.msk [vmem:[#allocation14] sm:$0xff] %vm142, %v279
    %v282 = vld [vmem:[#allocation5] sm:$0xff]
    %v283 = vld [vmem:[#allocation7] sm:$0xff]
    %v284 = vld [vmem:[#allocation7 + $0x8] sm:$0xff]
    %v285 = vld [vmem:[#allocation7 + $0x10] sm:$0xff]
    %v286 = vld [vmem:[#allocation7 + $0x18] sm:$0xff]
    %v288 = vsel %vm142, %v282, 0
    %290 = vmatpush.msra.mxu0 0.0
    %291 = vmatpush.msra.mxu0 0.0
    %292 = vmatpush.msra.mxu0 0.0
    %293 = vmatpush.msra.mxu0 0.0
    %294 = vmatpush.msra.mxu0 0.0
    %295 = vmatpush.msra.mxu0 0.0
    %296 = vmatpush.msra.mxu0 0.0
    %297 = vmatpush.msra.mxu0 0.0
    %298 = vmatpush.msra.mxu0 0.0
    %299 = vmatpush.msra.mxu0 0.0
    %300 = vmatpush.msra.mxu0 0.0
    %301 = vmatpush.msra.mxu0 0.0
    %302 = vmatpush.msra.mxu0 %v286
    %303 = vmatpush.msra.mxu0 %v285
    %304 = vmatpush.msra.mxu0 %v284
    %305 = vmatpush.msra.mxu0 %v283
    %306 = vmatmul.f32.gmra.mxu0 %v288
    %v307 = vpop.f32.mrf.mxu0
    %v308 = vadd.f32 %v141, %v307
    %309 = vdwg.mxu0
    %v310 = vmax.f32 %v308, 0.0
    %v311 = vld [vmem:[#allocation8] sm:$0xff]
    %v312 = vld [vmem:[#allocation8 + $0x8] sm:$0xff]
    %v313 = vld [vmem:[#allocation8 + $0x10] sm:$0xff]
    %v314 = vld [vmem:[#allocation8 + $0x18] sm:$0xff]
    %v315 = vld [vmem:[#allocation8 + $0x20] sm:$0xff]
    %v316 = vld [vmem:[#allocation8 + $0x28] sm:$0xff]
    %v317 = vld [vmem:[#allocation8 + $0x30] sm:$0xff]
    %v318 = vld [vmem:[#allocation8 + $0x38] sm:$0xff]
    %v319 = vld [vmem:[#allocation8 + $0x40] sm:$0xff]
    %v320 = vld [vmem:[#allocation8 + $0x48] sm:$0xff]
    %v321 = vld [vmem:[#allocation8 + $0x50] sm:$0xff]
    %v322 = vld [vmem:[#allocation8 + $0x58] sm:$0xff]
    %v323 = vld [vmem:[#allocation8 + $0x60] sm:$0xff]
    %v324 = vld [vmem:[#allocation8 + $0x68] sm:$0xff]
    %v325 = vld [vmem:[#allocation8 + $0x70] sm:$0xff]
    %v326 = vld [vmem:[#allocation8 + $0x78] sm:$0xff]
    %327 = vmatpush.msra.mxu0 %v326
    %328 = vmatpush.msra.mxu0 %v325
    %329 = vmatpush.msra.mxu0 %v324
    %330 = vmatpush.msra.mxu0 %v323
    %331 = vmatpush.msra.mxu0 %v322
    %332 = vmatpush.msra.mxu0 %v321
    %333 = vmatpush.msra.mxu0 %v320
    %334 = vmatpush.msra.mxu0 %v319
    %335 = vmatpush.msra.mxu0 %v318
    %336 = vmatpush.msra.mxu0 %v317
    %337 = vmatpush.msra.mxu0 %v316
    %338 = vmatpush.msra.mxu0 %v315
    %339 = vmatpush.msra.mxu0 %v314
    %340 = vmatpush.msra.mxu0 %v313
    %341 = vmatpush.msra.mxu0 %v312
    %342 = vmatpush.msra.mxu0 %v311
    %343 = vmatmul.f32.gmra.mxu0 %v310
    %v344 = vpop.f32.mrf.mxu0
    %v345 = vadd.f32 %v183, %v344
    %346 = vdwg.mxu0
    %347 = vst.msk [vmem:[%s8] sm:$0xff] %vm204, %v345
    %v348 = vld [vmem:[#allocation10] sm:$0xff]
    %v349 = vld [vmem:[#allocation10 + $0x8] sm:$0xff]
    %v350 = vld [vmem:[#allocation10 + $0x10] sm:$0xff]
    %v351 = vld [vmem:[#allocation10 + $0x18] sm:$0xff]
    %v352 = vld [vmem:[#allocation10 + $0x20] sm:$0xff]
    %v353 = vld [vmem:[#allocation10 + $0x28] sm:$0xff]
    %v354 = vld [vmem:[#allocation10 + $0x30] sm:$0xff]
    %v355 = vld [vmem:[#allocation10 + $0x38] sm:$0xff]
    %v356 = vld [vmem:[#allocation10 + $0x40] sm:$0xff]
    %v357 = vld [vmem:[#allocation10 + $0x48] sm:$0xff]
    %v358 = vld [vmem:[#allocation10 + $0x50] sm:$0xff]
    %v359 = vld [vmem:[#allocation10 + $0x58] sm:$0xff]
    %v360 = vld [vmem:[#allocation10 + $0x60] sm:$0xff]
    %v361 = vld [vmem:[#allocation10 + $0x68] sm:$0xff]
    %v362 = vld [vmem:[#allocation10 + $0x70] sm:$0xff]
    %v363 = vld [vmem:[#allocation10 + $0x78] sm:$0xff]
    %364 = vmatpush.msra.mxu0 %v363
    %365 = vmatpush.msra.mxu0 %v362
    %366 = vmatpush.msra.mxu0 %v361
    %367 = vmatpush.msra.mxu0 %v360
    %368 = vmatpush.msra.mxu0 %v359
    %369 = vmatpush.msra.mxu0 %v358
    %370 = vmatpush.msra.mxu0 %v357
    %371 = vmatpush.msra.mxu0 %v356
    %372 = vmatpush.msra.mxu0 %v355
    %373 = vmatpush.msra.mxu0 %v354
    %374 = vmatpush.msra.mxu0 %v353
    %375 = vmatpush.msra.mxu0 %v352
    %376 = vmatpush.msra.mxu0 %v351
    %377 = vmatpush.msra.mxu0 %v350
    %378 = vmatpush.msra.mxu0 %v349
    %379 = vmatpush.msra.mxu0 %v348
    %380 = vmatmul.f32.gmra.mxu0 %v345
    %v381 = vpop.f32.mrf.mxu0
    %v382 = vadd.f32 %v222, %v381
    %383 = vdwg.mxu0
    %v384 = vmax.f32 %v382, 0.0
    %v385 = vld [vmem:[#allocation11] sm:$0xff]
    %v386 = vld [vmem:[#allocation11 + $0x8] sm:$0xff]
    %v387 = vld [vmem:[#allocation11 + $0x10] sm:$0xff]
    %v388 = vld [vmem:[#allocation11 + $0x18] sm:$0xff]
    %v389 = vld [vmem:[#allocation11 + $0x20] sm:$0xff]
    %v390 = vld [vmem:[#allocation11 + $0x28] sm:$0xff]
    %v391 = vld [vmem:[#allocation11 + $0x30] sm:$0xff]
    %v392 = vld [vmem:[#allocation11 + $0x38] sm:$0xff]
    %v393 = vld [vmem:[#allocation11 + $0x40] sm:$0xff]
    %v394 = vld [vmem:[#allocation11 + $0x48] sm:$0xff]
    %v395 = vld [vmem:[#allocation11 + $0x50] sm:$0xff]
    %v396 = vld [vmem:[#allocation11 + $0x58] sm:$0xff]
    %v397 = vld [vmem:[#allocation11 + $0x60] sm:$0xff]
    %v398 = vld [vmem:[#allocation11 + $0x68] sm:$0xff]
    %v399 = vld [vmem:[#allocation11 + $0x70] sm:$0xff]
    %v400 = vld [vmem:[#allocation11 + $0x78] sm:$0xff]
    %401 = vmatpush.msra.mxu0 %v400
    %402 = vmatpush.msra.mxu0 %v399
    %403 = vmatpush.msra.mxu0 %v398
    %404 = vmatpush.msra.mxu0 %v397
    %405 = vmatpush.msra.mxu0 %v396
    %406 = vmatpush.msra.mxu0 %v395
    %407 = vmatpush.msra.mxu0 %v394
    %408 = vmatpush.msra.mxu0 %v393
    %409 = vmatpush.msra.mxu0 %v392
    %410 = vmatpush.msra.mxu0 %v391
    %411 = vmatpush.msra.mxu0 %v390
    %412 = vmatpush.msra.mxu0 %v389
    %413 = vmatpush.msra.mxu0 %v388
    %414 = vmatpush.msra.mxu0 %v387
    %415 = vmatpush.msra.mxu0 %v386
    %416 = vmatpush.msra.mxu0 %v385
    %417 = vmatmul.f32.gmra.mxu0 %v384
    %v418 = vpop.f32.mrf.mxu0
    %v419 = vadd.f32 %v260, %v418
    %420 = vdwg.mxu0
    %421 = vst.msk [vmem:[#allocation15] sm:$0xff] %vm142, %v419
    // Predicated region
    $region58: #{vis_model_forward.1} parent=1 // pred_check
      _
    $region59: #{vis_model_forward.1} parent=1 // pred_check_branch
      %423 = sbr.rel (0) target = $region61
    $region60: #{vis_model_forward.1} parent=1 // pred_region
      _
    $region61: #{vis_model_forward.1} parent=1 // pred_fallthru
      _
    // Predicated region
    $region62: #{vis_model_forward.1} parent=1 // pred_check
      _
    $region63: #{vis_model_forward.1} parent=1 // pred_check_branch
      %425 = sbr.rel (0) target = $region65
    $region64: #{vis_model_forward.1} parent=1 // pred_region
      _
    $region65: #{vis_model_forward.1} parent=1 // pred_fallthru
      _
    // Predicated region
    $region66: #{vis_model_forward.1} parent=1 // pred_check
      _
    $region67: #{vis_model_forward.1} parent=1 // pred_check_branch
      %427 = sbr.rel (0) target = $region69
    $region68: #{vis_model_forward.1} parent=1 // pred_region
      %429 = vsyncadd [#allocation4], 0
      %s431 = sshll.u32 [#allocation14], 4
      %s432 = int_to_ptr.vmem [resolvable:$true] %s431
      %s433 = sshll.u32 %s9, 4
      %s434 = int_to_ptr.hbm [resolvable:$true] %s433
      %436 = dma.vmem_to_hbm [thread:$0]  %s432, 128, %s434, [#allocation4]
    $region69: #{vis_model_forward.1} parent=1 // pred_fallthru
      _
    // Predicated region
    $region70: #{vis_model_forward.1} parent=1 // pred_check
      _
    $region71: #{vis_model_forward.1} parent=1 // pred_check_branch
      %438 = sbr.rel (0) target = $region73
    $region72: #{vis_model_forward.1} parent=1 // pred_region
      %440 = vsyncadd [#allocation16], 0
      %s442 = sshll.u32 [#allocation15], 4
      %s443 = int_to_ptr.vmem [resolvable:$true] %s442
      %s444 = sshll.u32 %s10, 4
      %s445 = int_to_ptr.hbm [resolvable:$true] %s444
      %447 = dma.vmem_to_hbm [thread:$0]  %s443, 128, %s445, [#allocation16]
    $region73: #{vis_model_forward.1} parent=1 // pred_fallthru
      _
    // Predicated region
    $region74: #{vis_model_forward.1} parent=1 // pred_check
      _
    $region75: #{vis_model_forward.1} parent=1 // pred_check_branch
      %449 = sbr.rel (0) target = $region77
    $region76: #{vis_model_forward.1} parent=1 // pred_region
      _
    $region77: #{vis_model_forward.1} parent=1 // pred_fallthru
      _
    // Predicated region
    $region78: #{vis_model_forward.1} parent=1 // pred_check
      _
    $region79: #{vis_model_forward.1} parent=1 // pred_check_branch
      %451 = sbr.rel (0) target = $region81
    $region80: #{vis_model_forward.1} parent=1 // pred_region
      _
    $region81: #{vis_model_forward.1} parent=1 // pred_fallthru
      _
    // Predicated region
    $region82: #{vis_model_forward.1} parent=1 // pred_check
      _
    $region83: #{vis_model_forward.1} parent=1 // pred_check_branch
      %453 = sbr.rel (0) target = $region85
    $region84: #{vis_model_forward.1} parent=1 // pred_region
      %455 = dma.done [#allocation4], 128
    $region85: #{vis_model_forward.1} parent=1 // pred_fallthru
      _
    // Predicated region
    $region86: #{vis_model_forward.1} parent=1 // pred_check
      _
    $region87: #{vis_model_forward.1} parent=1 // pred_check_branch
      %457 = sbr.rel (0) target = $region89
    $region88: #{vis_model_forward.1} parent=1 // pred_region
      %459 = dma.done [#allocation16], 128
    $region89: #{vis_model_forward.1} parent=1 // pred_fallthru
      _
    %460 = vsyncpa [#allocation3], 1
    %461 = vsyncpa [#allocation6], 1
    %462 = vsyncpa [#allocation9], 1
    %463 = vsyncpa [#allocation12], 1
    %464 = vsyncpa [#allocation4], 1
    %465 = vsyncpa [#allocation16], 1

</llo_original>
